<compile_context>
chip_gen: v7x
topology: tpu7x:2x2x1
jax: 0.10.0
libtpu: 0.0.40
codegen_flags: <defaults>
</compile_context>

<pallas_src>
import functools
import math

import jax
import jax.numpy as jnp
from jax.experimental import pallas as pl
from jax.experimental.pallas import tpu as pltpu


# ---------------------------------------------------------------------------
# Pallas kernel
# ---------------------------------------------------------------------------

def _upsample_concat_kernel(x1_ref, skip_ref, w_ref, b_ref, o_ref, *, cout, cskip):
    """Fused ConvTranspose2d(2,2) + bias + subpixel-interleave + channel concat.

    x1_ref  : (tr*W, Kp)                 x1 dtype (cast to w dtype in-register)
    skip_ref: (tr, 2, W, 2*cskip)        skip dtype; lanes = (dx, skip channel)
    w_ref   : (Kp, 4*cout)               compute dtype; cols ordered (dy, dx, co)
    b_ref   : (1, 4*cout)                f32 (bias tiled over the 4 sub-pixels)
    o_ref   : (tr, 2, W, 2*(cout+cskip)) lanes = (dx, [conv co | skip c])
    """
    tr, _, wdt, _ = o_ref.shape

    # One MXU matmul: every input pixel independently produces its 2x2 output block.
    xb = x1_ref[...].astype(w_ref.dtype)          # no-op if already compute dtype
    p = jnp.dot(xb, w_ref[...], preferred_element_type=jnp.float32)
    p = (p + b_ref[...]).astype(o_ref.dtype).reshape(tr, wdt, 4 * cout)  # free split

    skip = skip_ref[...].astype(o_ref.dtype)      # no-op in the common same-dtype case

    for dy in range(2):                            # output row parity (static)
        # Assemble one full lane row, then a single unmasked store (no 8x vst.msk).
        row = jnp.concatenate(
            [p[:, :, (2 * dy) * cout:(2 * dy + 1) * cout],       # conv, dx = 0
             skip[:, dy, :, 0:cskip],                            # skip, dx = 0
             p[:, :, (2 * dy + 1) * cout:(2 * dy + 2) * cout],   # conv, dx = 1
             skip[:, dy, :, cskip:2 * cskip]],                   # skip, dx = 1
            axis=-1)
        o_ref[:, dy, :, :] = row


# ---------------------------------------------------------------------------
# Tiling helpers
# ---------------------------------------------------------------------------

def _round_up(n, m):
    return ((n + m - 1) // m) * m


def _tpu_vmem_capacity():
    try:
        return int(pltpu.get_tpu_info().vmem_capacity_bytes)
    except Exception:
        return 64 << 20   # conservative (v7x-sized) fallback


def _fused_upsample_call(x1_flat, skip_slab, wslab, b4, *, R, W, Cout, Cskip, out_dtype):
    """pallas_call over row tiles. x1_flat: (R*W, Kp); skip_slab: (R, 2, W, 2*Cskip)."""
    Kp = x1_flat.shape[1]
    Ctot = Cout + Cskip

    # --- chip-aware tile sizing ---------------------------------------------
    vmem_cap = _tpu_vmem_capacity()
    small_vmem = vmem_cap < (100 << 20)        # v7x: 64 MiB/TC; v5e/v6e: 128 MiB
    target_bytes = (6 << 20) if small_vmem else (12 << 20)
    min_steps = 8 if small_vmem else 4         # v7x megacore wants >= 4 steps/core

    x1_b = jnp.dtype(x1_flat.dtype).itemsize
    sk_b = jnp.dtype(skip_slab.dtype).itemsize
    o_b = jnp.dtype(out_dtype).itemsize
    bytes_per_row = (W * Kp * x1_b                     # x1 rows
                     + 2 * W * 2 * Cskip * sk_b        # skip rows
                     + 2 * W * 2 * Ctot * o_b)         # output rows

    # Keep the (tr*W, Kp) x1 block's sublane dim a multiple of the packing tile.
    sub = 8 * (4 // min(4, x1_b))                      # 8 (f32), 16 (bf16), 32 (i8)
    row_align = sub // math.gcd(W, sub)

    cap = max(1, target_bytes // max(bytes_per_row, 1))
    cap = min(cap, max(8, pl.cdiv(R, min_steps)))      # keep enough grid steps
    tr = min(R, cap)
    if tr < R:
        tr = max(row_align, (tr // row_align) * row_align)
        tr = min(tr, R)
    steps = pl.cdiv(R, tr)

    blk_bytes = tr * bytes_per_row
    fixed_bytes = (wslab.size * jnp.dtype(wslab.dtype).itemsize + b4.size * 4)
    # Pallas double-buffers every block (incl. the grid-invariant weight/bias).
    vmem_need = 2 * blk_bytes + 2 * fixed_bytes + (2 << 20)
    vmem_limit = int(min(max(vmem_need, 16 << 20), int(vmem_cap * 0.9)))

    kernel = functools.partial(_upsample_concat_kernel, cout=Cout, cskip=Cskip)
    return pl.pallas_call(
        kernel,
        out_shape=jax.ShapeDtypeStruct((R, 2, W, 2 * Ctot), out_dtype),
        grid=(steps,),
        in_specs=[
            pl.BlockSpec((tr * W, Kp), lambda r: (r, 0)),
            pl.BlockSpec((tr, 2, W, 2 * Cskip), lambda r: (r, 0, 0, 0)),
            pl.BlockSpec((Kp, 4 * Cout), lambda r: (0, 0)),
            pl.BlockSpec((1, 4 * Cout), lambda r: (0, 0)),
        ],
        out_specs=pl.BlockSpec((tr, 2, W, 2 * Ctot), lambda r: (r, 0, 0, 0)),
        compiler_params=pltpu.CompilerParams(
            dimension_semantics=("parallel",),
            vmem_limit_bytes=vmem_limit,
        ),
    )(x1_flat, skip_slab, wslab, b4)


# ---------------------------------------------------------------------------
# NHWC fast path: zero wrapper layout passes (all reshapes are free bitcasts)
# ---------------------------------------------------------------------------

def unet_upsample_nhwc(x1, x2, weight, bias, *, compute_dtype=jnp.bfloat16,
                       out_dtype=None):
    """x1: (N, H, W, Cin); x2: (N, H2, W2, Cskip); weight: (Cin, Cout, 2, 2);
    bias: (Cout,). Returns (N, 2H, 2W, Cout+Cskip) NHWC."""
    N, H, W, Cin = x1.shape
    Cin_w, Cout, kh, kw = weight.shape
    assert (kh, kw) == (2, 2) and Cin_w == Cin
    Nb, H2, W2, Cskip = x2.shape
    assert Nb == N
    Ho, Wo = 2 * H, 2 * W
    # TODO(synk): TVF.center_crop pads when the target exceeds the source; only the
    # crop case (skip >= 2x spatial) is implemented here.
    assert H2 >= Ho and W2 >= Wo, "skip smaller than upsampled x1"
    if out_dtype is None:
        out_dtype = jnp.promote_types(x1.dtype, x2.dtype)

    # torchvision center_crop offsets: int(round(diff / 2.0))
    top = int(round((H2 - Ho) / 2.0))
    left = int(round((W2 - Wo) / 2.0))
    R = N * H
    Ctot = Cout + Cskip

    # x1 -> (R*W, Kp): pure row-major reshape (free). Pad K only to the packing
    # granularity (16 for 2-byte compute dtype); a no-op for Cin in {16,32,...,1024}.
    pack = 16 if jnp.dtype(compute_dtype).itemsize == 2 else 8
    Kp = _round_up(Cin, pack)
    x1_flat = x1.reshape(R * W, Cin)
    if Kp != Cin:
        x1_flat = jnp.pad(x1_flat, ((0, 0), (0, Kp - Cin)))

    # Static center crop (no-op when shapes already match) + free reshape to the
    # (row, dy, w, (dx, c)) slab. dtype cast happens in-kernel.
    x2c = x2 if (H2 == Ho and W2 == Wo) else x2[:, top:top + Ho, left:left + Wo, :]
    skip_slab = x2c.reshape(R, 2, W, 2 * Cskip)

    # weight: (Cin, Cout, 2, 2) -> (Kp, 4*Cout), columns ordered (dy, dx, co)
    wslab = jnp.transpose(weight, (0, 2, 3, 1)).reshape(Cin, 4 * Cout)
    wslab = wslab.astype(compute_dtype)
    if Kp != Cin:
        wslab = jnp.pad(wslab, ((0, Kp - Cin), (0, 0)))
    b4 = jnp.tile(bias.astype(jnp.float32), 4).reshape(1, 4 * Cout)

    out_slab = _fused_upsample_call(x1_flat, skip_slab, wslab, b4,
                                    R=R, W=W, Cout=Cout, Cskip=Cskip,
                                    out_dtype=out_dtype)
    # Free bitcast reshape: (R, 2, W, 2, Ctot) row-major == (N, 2H, 2W, Ctot).
    return out_slab.reshape(N, Ho, Wo, Ctot)


# ---------------------------------------------------------------------------
# NCHW entry point (PyTorch-compatible semantics)
# ---------------------------------------------------------------------------

def unet_upsample(x1, x2, weight, bias, *, compute_dtype=jnp.bfloat16):
    """x1: (N, Cin, H, W); x2: (N, Cskip, H2, W2). Returns NCHW (N, Cout+Cskip, 2H, 2W).

    The three layout passes (x1 in, cropped x2 in, output back) are inherent to the
    NCHW boundary; call unet_upsample_nhwc directly to avoid them entirely."""
    N, Cin, H, W = x1.shape
    Nb, Cskip, H2, W2 = x2.shape
    assert Nb == N
    Ho, Wo = 2 * H, 2 * W
    assert H2 >= Ho and W2 >= Wo, "skip smaller than upsampled x1"
    out_dtype = jnp.promote_types(x1.dtype, x2.dtype)

    top = int(round((H2 - Ho) / 2.0))
    left = int(round((W2 - Wo) / 2.0))

    # NCHW -> NHWC; bf16 cast fused into the x1 transpose (halves the kernel's read),
    # crop fused into the x2 transpose (only the needed window is moved).
    x1_nhwc = jnp.transpose(x1, (0, 2, 3, 1)).astype(compute_dtype)
    x2_nhwc = jnp.transpose(x2[:, :, top:top + Ho, left:left + Wo], (0, 2, 3, 1))

    out_nhwc = unet_upsample_nhwc(x1_nhwc, x2_nhwc, weight, bias,
                                  compute_dtype=compute_dtype, out_dtype=out_dtype)
    return jnp.transpose(out_nhwc, (0, 3, 1, 2))     # back to NCHW


# ---------------------------------------------------------------------------
# Pure-JAX reference (same bf16 operands, f32 accumulation) for validation
# ---------------------------------------------------------------------------

def _reference(x1, x2, weight, bias, compute_dtype):
    N, Cin, H, W = x1.shape
    Cout = weight.shape[1]
    Ho, Wo = 2 * H, 2 * W
    y = jnp.einsum("nihw,iokl->nohkwl",
                   x1.astype(compute_dtype), weight.astype(compute_dtype),
                   preferred_element_type=jnp.float32)
    y = y.reshape(N, Cout, Ho, Wo) + bias[None, :, None, None]
    H2, W2 = x2.shape[-2:]
    top = int(round((H2 - Ho) / 2.0))
    left = int(round((W2 - Wo) / 2.0))
    x2c = x2[:, :, top:top + Ho, left:left + Wo]
    out_dtype = jnp.promote_types(x1.dtype, x2.dtype)
    return jnp.concatenate([y.astype(out_dtype), x2c.astype(out_dtype)], axis=1)


# ---------------------------------------------------------------------------
# Demo
# ---------------------------------------------------------------------------

if __name__ == "__main__":
    N, C_IN, H, W = 2, 64, 8, 8          # x1: pre-upsample decoder feature map
    C_OUT, C_SKIP = 32, 32               # 2*(C_OUT+C_SKIP) = 128 -> lane-dense output
    H2, W2 = 18, 18                      # skip slightly larger -> exercises center_crop

    key = jax.random.PRNGKey(0)
    k1, k2, kw, kb = jax.random.split(key, 4)
    x1 = jax.random.normal(k1, (N, C_IN, H, W), jnp.float32)
    x2 = jax.random.normal(k2, (N, C_SKIP, H2, W2), jnp.float32)
    wgt = jax.random.normal(kw, (C_IN, C_OUT, 2, 2), jnp.float32) / math.sqrt(C_IN * 4)
    b = jax.random.normal(kb, (C_OUT,), jnp.float32) * 0.01

    fwd = jax.jit(unet_upsample)
    out = fwd(x1, x2, wgt, b)
    jax.block_until_ready(out)

    assert out.shape == (N, C_OUT + C_SKIP, 2 * H, 2 * W), out.shape
    assert out.dtype == jnp.float32, out.dtype

    ref = _reference(x1, x2, wgt, b, jnp.bfloat16)
    max_err = float(jnp.max(jnp.abs(out - ref)))
    assert max_err < 2e-2, f"max abs error {max_err}"

    print("KERNEL_OK")
</pallas_src>

<mosaic_0001>
module attributes {stable_mosaic.version = 11 : i64} {
  func.func @_upsample_concat_kernel(%arg0: i32, %arg1: memref<64x64xbf16, #tpu.memory_space<vmem>>, %arg2: memref<8x2x8x64xf32, #tpu.memory_space<vmem>>, %arg3: memref<64x128xbf16, #tpu.memory_space<vmem>>, %arg4: memref<1x128xf32, #tpu.memory_space<vmem>>, %arg5: memref<8x2x8x128xf32, #tpu.memory_space<vmem>>) attributes {dimension_semantics = [#tpu.dimension_semantics<parallel>], iteration_bounds = array<i64: 2>, scalar_prefetch = 0 : i64, scratch_operands = 0 : i64, tpu.core_type = #tpu.core_type<tc>, window_params = [{transform_indices = @transform_0, window_bounds = array<i64: 64, 64>}, {transform_indices = @transform_1, window_bounds = array<i64: 8, 2, 8, 64>}, {pipeline_mode = #tpu.pipeline_mode<synchronous>, transform_indices = @transform_2, window_bounds = array<i64: 64, 128>}, {pipeline_mode = #tpu.pipeline_mode<synchronous>, transform_indices = @transform_3, window_bounds = array<i64: 1, 128>}, {transform_indices = @transform_4, window_bounds = array<i64: 8, 2, 8, 128>}]} {
    %c0 = arith.constant 0 : index
    %c0_0 = arith.constant 0 : index
    %0 = vector.load %arg1[%c0, %c0_0] : memref<64x64xbf16, #tpu.memory_space<vmem>>, vector<64x64xbf16>
    %c0_1 = arith.constant 0 : index
    %c0_2 = arith.constant 0 : index
    %1 = vector.load %arg3[%c0_1, %c0_2] : memref<64x128xbf16, #tpu.memory_space<vmem>>, vector<64x128xbf16>
    %cst = arith.constant dense<0.000000e+00> : vector<64x128xf32>
    %2 = tpu.matmul %0, %1, %cst {dimension_numbers = #tpu.dot_dimension_numbers<[1], [0], [0], [1], [0, 0, 1, 1], [], []>} : vector<64x64xbf16>, vector<64x128xbf16>, vector<64x128xf32> -> vector<64x128xf32>
    %c0_3 = arith.constant 0 : index
    %c0_4 = arith.constant 0 : index
    %3 = vector.load %arg4[%c0_3, %c0_4] : memref<1x128xf32, #tpu.memory_space<vmem>>, vector<1x128xf32>
    %4 = vector.broadcast %3 : vector<1x128xf32> to vector<64x128xf32>
    %5 = arith.addf %2, %4 : vector<64x128xf32>
    %6 = vector.shape_cast %5 : vector<64x128xf32> to vector<8x8x128xf32>
    %c0_5 = arith.constant 0 : index
    %c0_6 = arith.constant 0 : index
    %c0_7 = arith.constant 0 : index
    %c0_8 = arith.constant 0 : index
    %7 = vector.load %arg2[%c0_5, %c0_6, %c0_7, %c0_8] : memref<8x2x8x64xf32, #tpu.memory_space<vmem>>, vector<8x2x8x64xf32>
    %8 = vector.extract_strided_slice %6 {offsets = [0, 0, 0], sizes = [8, 8, 32], strides = [1, 1, 1]} : vector<8x8x128xf32> to vector<8x8x32xf32>
    %9 = vector.extract_strided_slice %7 {offsets = [0, 0, 0, 0], sizes = [8, 1, 8, 32], strides = [1, 1, 1, 1]} : vector<8x2x8x64xf32> to vector<8x1x8x32xf32>
    %10 = vector.shape_cast %9 : vector<8x1x8x32xf32> to vector<8x8x32xf32>
    %11 = vector.extract_strided_slice %6 {offsets = [0, 0, 32], sizes = [8, 8, 32], strides = [1, 1, 1]} : vector<8x8x128xf32> to vector<8x8x32xf32>
    %12 = vector.extract_strided_slice %7 {offsets = [0, 0, 0, 32], sizes = [8, 1, 8, 32], strides = [1, 1, 1, 1]} : vector<8x2x8x64xf32> to vector<8x1x8x32xf32>
    %13 = vector.shape_cast %12 : vector<8x1x8x32xf32> to vector<8x8x32xf32>
    %14 = tpu.concatenate %8, %10, %11, %13 in 2 : vector<8x8x32xf32>, vector<8x8x32xf32>, vector<8x8x32xf32>, vector<8x8x32xf32> -> vector<8x8x128xf32>
    %c0_9 = arith.constant 0 : index
    %c0_10 = arith.constant 0 : index
    %c0_11 = arith.constant 0 : index
    %c0_12 = arith.constant 0 : index
    %15 = vector.load %arg5[%c0_9, %c0_10, %c0_11, %c0_12] : memref<8x2x8x128xf32, #tpu.memory_space<vmem>>, vector<8x1x8x128xf32>
    %16 = vector.shape_cast %15 : vector<8x1x8x128xf32> to vector<8x8x128xf32>
    %17 = vector.shape_cast %14 : vector<8x8x128xf32> to vector<8x1x8x128xf32>
    tpu.vector_store %arg5[%c0_9, %c0_10, %c0_11, %c0_12], %17 {strides = array<i32>} : memref<8x2x8x128xf32, #tpu.memory_space<vmem>>, vector<8x1x8x128xf32>,
    %18 = vector.extract_strided_slice %6 {offsets = [0, 0, 64], sizes = [8, 8, 32], strides = [1, 1, 1]} : vector<8x8x128xf32> to vector<8x8x32xf32>
    %19 = vector.extract_strided_slice %7 {offsets = [0, 1, 0, 0], sizes = [8, 1, 8, 32], strides = [1, 1, 1, 1]} : vector<8x2x8x64xf32> to vector<8x1x8x32xf32>
    %20 = vector.shape_cast %19 : vector<8x1x8x32xf32> to vector<8x8x32xf32>
    %21 = vector.extract_strided_slice %6 {offsets = [0, 0, 96], sizes = [8, 8, 32], strides = [1, 1, 1]} : vector<8x8x128xf32> to vector<8x8x32xf32>
    %22 = vector.extract_strided_slice %7 {offsets = [0, 1, 0, 32], sizes = [8, 1, 8, 32], strides = [1, 1, 1, 1]} : vector<8x2x8x64xf32> to vector<8x1x8x32xf32>
    %23 = vector.shape_cast %22 : vector<8x1x8x32xf32> to vector<8x8x32xf32>
    %24 = tpu.concatenate %18, %20, %21, %23 in 2 : vector<8x8x32xf32>, vector<8x8x32xf32>, vector<8x8x32xf32>, vector<8x8x32xf32> -> vector<8x8x128xf32>
    %c0_13 = arith.constant 0 : index
    %c1 = arith.constant 1 : index
    %c0_14 = arith.constant 0 : index
    %c0_15 = arith.constant 0 : index
    %25 = vector.load %arg5[%c0_13, %c1, %c0_14, %c0_15] : memref<8x2x8x128xf32, #tpu.memory_space<vmem>>, vector<8x1x8x128xf32>
    %26 = vector.shape_cast %25 : vector<8x1x8x128xf32> to vector<8x8x128xf32>
    %27 = vector.shape_cast %24 : vector<8x8x128xf32> to vector<8x1x8x128xf32>
    tpu.vector_store %arg5[%c0_13, %c1, %c0_14, %c0_15], %27 {strides = array<i32>} : memref<8x2x8x128xf32, #tpu.memory_space<vmem>>, vector<8x1x8x128xf32>,
    return
  }
  func.func @transform_0(%arg0: i32) -> (i32, i32) {
    %c0_i32 = arith.constant 0 : i32
    %c0_i32_0 = arith.constant 0 : i32
    return %arg0, %c0_i32 : i32, i32
  }
  func.func @transform_1(%arg0: i32) -> (i32, i32, i32, i32) {
    %c0_i32 = arith.constant 0 : i32
    %c0_i32_0 = arith.constant 0 : i32
    %c0_i32_1 = arith.constant 0 : i32
    %c0_i32_2 = arith.constant 0 : i32
    return %arg0, %c0_i32, %c0_i32_0, %c0_i32_1 : i32, i32, i32, i32
  }
  func.func @transform_2(%arg0: i32) -> (i32, i32) {
    %c0_i32 = arith.constant 0 : i32
    %c0_i32_0 = arith.constant 0 : i32
    %c0_i32_1 = arith.constant 0 : i32
    return %c0_i32, %c0_i32_0 : i32, i32
  }
  func.func @transform_3(%arg0: i32) -> (i32, i32) {
    %c0_i32 = arith.constant 0 : i32
    %c0_i32_0 = arith.constant 0 : i32
    %c0_i32_1 = arith.constant 0 : i32
    return %c0_i32, %c0_i32_0 : i32, i32
  }
  func.func @transform_4(%arg0: i32) -> (i32, i32, i32, i32) {
    %c0_i32 = arith.constant 0 : i32
    %c0_i32_0 = arith.constant 0 : i32
    %c0_i32_1 = arith.constant 0 : i32
    %c0_i32_2 = arith.constant 0 : i32
    return %arg0, %c0_i32, %c0_i32_0, %c0_i32_1 : i32, i32, i32, i32
  }
}

</mosaic_0001>

<llo_original>
// kernel: tile.8
$region0: #{tile.8}
  #allocation0 [shape = 's32[1]{0}', space=sflag, size = 0x4, scoped, tag = 'scoped memory for tile.8']
  %s0 = inlined_call_operand.vmem [shape: f32[32], index: 0, kind: input, shape index: {}]
  %s1 = inlined_call_operand.vmem [shape: f32[4,32], index: 1, kind: output, shape index: {}]
  // Predicated region
  $region2: #{tile.8} parent=0 // pred_check
    _
  $region3: #{tile.8} parent=0 // pred_check_branch
    %3 = sbr.rel (0) target = $region5
  $region4: #{tile.8} parent=0 // pred_region
    _
  $region5: #{tile.8} parent=0 // pred_fallthru
    _
  %v4 = vld [vmem:[%s0] ss:$0 sm:$0xff]
  %5 = vst [vmem:[%s1] sm:$0xf] %v4

// kernel: tile.9
$region0: #{tile.9}
  %s0 = inlined_call_operand.vmem [shape: f32[4,32], index: 0, kind: input, shape index: {}]
  %s1 = inlined_call_operand.vmem [shape: f32[1,128], index: 1, kind: output, shape index: {}]
  $region1: #{tile.9} parent=0
    #allocation0 [shape = 'u8[4096]{0}', space=vmem, size = 0x1000, scoped, tag = 'scoped mem for output reshape']
    #allocation1 [shape = 'u8[4096]{0}', space=vmem, size = 0x1000, scoped, tag = 'scoped mem for input reshape']
    %s3 = sshllo.u32 0, 4
    %v4 = vld [vmem:[%s0] sm:%s3]
    %5 = vst [vmem:[#allocation1] sm:%s3] %v4
    %v6 = vld [vmem:[#allocation1] sm:$0x1]
    %vm7 = vcmask 261120
    %8 = vst.msk [vmem:[#allocation0] sm:$0x1] %vm7, %v6
    %s9 = scalar_lea.vmem [#allocation1], 3
    %v10 = vld [vmem:[%s9] sm:$0x1]
    %11 = vrot.lane.b32.xlu0 %v10, 96
    %v12 = vpop.permute.xlu0 %11
    %vm13 = vcmask 1048320
    %14 = vst.msk [vmem:[#allocation0] sm:$0x1] %vm13, %v12
    %s15 = scalar_lea.vmem [#allocation1], 2
    %v16 = vld [vmem:[%s15] sm:$0x1]
    %17 = vrot.lane.b32.xlu0 %v16, 64
    %v18 = vpop.permute.xlu0 %17
    %vm19 = vcmask 785920
    %20 = vst.msk [vmem:[#allocation0] sm:$0x1] %vm19, %v18
    %s21 = scalar_lea.vmem [#allocation1], 1
    %v22 = vld [vmem:[%s21] sm:$0x1]
    %23 = vrot.lane.b32.xlu0 %v22, 32
    %v24 = vpop.permute.xlu0 %23
    %vm25 = vcmask 523520
    %26 = vst.msk [vmem:[#allocation0] sm:$0x1] %vm25, %v24
    %s28 = sshllo.u32 0, 1
    %v30 = vld [vmem:[#allocation0] sm:%s28]
    %s31 = sshllo.u32 0, 1
    %32 = vst [vmem:[%s1] sm:%s31] %v30

// kernel: unet_upsample.1
$region0: #{unet_upsample.1}
  #allocation0 [shape = 'u32[]', space=smem, size = 0x4, offset = 0x4, fixed_abs, tag = 'smem constant byte address 0x4 - core index']
  #allocation1 [shape = 'u32[144,128]{1,0:T(1,128)}', space=vmem, size = 0x12000, scoped, tag = 'internal scratch']
  %s0 = inlined_call_operand.vmem [shape: bf16[128,64], index: 0, kind: input, shape index: {}]
  %s1 = inlined_call_operand.vmem [shape: f32[16,2,8,64], index: 1, kind: input, shape index: {}]
  %s2 = inlined_call_operand.vmem [shape: bf16[64,128], index: 2, kind: input, shape index: {}]
  %s3 = inlined_call_operand.vmem [shape: f32[1,128], index: 3, kind: input, shape index: {}]
  %s4 = inlined_call_operand.vmem [shape: f32[16,2,8,128], index: 4, kind: output, shape index: {}]
  %s5 = sld [smem:[#allocation0]]
  $region49: #{unet_upsample.1} parent=0
    _
  %s7 = ssub.s32 1, %s5
  %s8 = scalar_select 0, %s7, %s5
  loop: start=0, step=1, limit=4
  $region2: #{unet_upsample.1} parent=0 // loop_pre_header
    _
  $region3: #{unet_upsample.1} parent=0 // loop_header
    %s10 = sphi 0, %s14
    %p11 = scmp.ge.s32.totalorder %s10, 4
    %s20 = sphi 0, %s22
    %s23 = sphi 0, %s20
    %s24 = sphi 0, %s23
    %s40 = sphi 0, %s24
    %s46 = sphi 0, %s48
    %s49 = sphi 0, %s46
    %s50 = sphi 0, %s49
    %s66 = sphi 0, %s50
    %s70 = sphi 0, %s70
    %s72 = sphi 0, %s70
    %s73 = sphi 0, %s72
    %s87 = sphi 0, %s73
    %s91 = sphi 0, %s91
    %s93 = sphi 0, %s91
    %s94 = sphi 0, %s93
    %s108 = sphi 0, %s94
    %s114 = sphi 0, %s116
    %s117 = sphi 0, %s114
    %s118 = sphi 0, %s117
    %s134 = sphi 0, %s118
  $region4: #{unet_upsample.1} parent=0 // loop_header_branch
    %13 = sbr.rel (%p11) target = $region8
  $region5: #{unet_upsample.1} parent=0 // loop_body
    %s15 = ssub.s32 %s10, 1
    %s16 = ssub.s32 %s10, 2
    %s17 = sadd.s32 %s10, 1
    %s18 = ssub.s32 %s10, %s17
    %p19 = scmp.eq.s32.totalorder %s18, 0
    %s21 = sadd.s32 %s20, 1
    %s22 = scalar_select %p19, %s20, %s21
    %p25 = pneg %p19
    %p26 = scmp.eq.s32.totalorder %s10, 1
    %p27 = por %p25, %p26
    %p28 = scmp.ne.s32.totalorder %s20, %s23
    %p29 = scmp.eq.s32.totalorder %s10, 0
    %p30 = por %p28, %p29
    %p31 = scmp.ne.s32.totalorder %s20, %s23
    %p32 = scmp.eq.s32.totalorder %s15, 1
    %p33 = por %p31, %p32
    %p34 = scmp.ne.s32.totalorder %s23, %s24
    %p35 = scmp.eq.s32.totalorder %s15, 0
    %p36 = por %p34, %p35
    %p37 = scmp.ne.s32.totalorder %s23, %s24
    %p38 = scmp.eq.s32.totalorder %s16, 1
    %p39 = por %p37, %p38
    %p41 = scmp.ne.s32.totalorder %s24, %s40
    %p42 = scmp.eq.s32.totalorder %s16, 0
    %p43 = por %p41, %p42
    %s44 = ssub.s32 %s10, %s17
    %p45 = scmp.eq.s32.totalorder %s44, 0
    %s47 = sadd.s32 %s46, 1
    %s48 = scalar_select %p45, %s46, %s47
    %p51 = pneg %p45
    %p52 = scmp.eq.s32.totalorder %s10, 1
    %p53 = por %p51, %p52
    %p54 = scmp.ne.s32.totalorder %s46, %s49
    %p55 = scmp.eq.s32.totalorder %s10, 0
    %p56 = por %p54, %p55
    %p57 = scmp.ne.s32.totalorder %s46, %s49
    %p58 = scmp.eq.s32.totalorder %s15, 1
    %p59 = por %p57, %p58
    %p60 = scmp.ne.s32.totalorder %s49, %s50
    %p61 = scmp.eq.s32.totalorder %s15, 0
    %p62 = por %p60, %p61
    %p63 = scmp.ne.s32.totalorder %s49, %s50
    %p64 = scmp.eq.s32.totalorder %s16, 1
    %p65 = por %p63, %p64
    %p67 = scmp.ne.s32.totalorder %s50, %s66
    %p68 = scmp.eq.s32.totalorder %s16, 0
    %p69 = por %p67, %p68
    %s71 = sadd.s32 %s70, 1
    %p74 = scmp.eq.s32.totalorder %s10, 1
    %p75 = scmp.ne.s32.totalorder %s70, %s72
    %p76 = scmp.eq.s32.totalorder %s10, 0
    %p77 = por %p75, %p76
    %p78 = scmp.ne.s32.totalorder %s70, %s72
    %p79 = scmp.eq.s32.totalorder %s15, 1
    %p80 = por %p78, %p79
    %p81 = scmp.ne.s32.totalorder %s72, %s73
    %p82 = scmp.eq.s32.totalorder %s15, 0
    %p83 = por %p81, %p82
    %p84 = scmp.ne.s32.totalorder %s72, %s73
    %p85 = scmp.eq.s32.totalorder %s16, 1
    %p86 = por %p84, %p85
    %p88 = scmp.ne.s32.totalorder %s73, %s87
    %p89 = scmp.eq.s32.totalorder %s16, 0
    %p90 = por %p88, %p89
    %s92 = sadd.s32 %s91, 1
    %p95 = scmp.eq.s32.totalorder %s10, 1
    %p96 = scmp.ne.s32.totalorder %s91, %s93
    %p97 = scmp.eq.s32.totalorder %s10, 0
    %p98 = por %p96, %p97
    %p99 = scmp.ne.s32.totalorder %s91, %s93
    %p100 = scmp.eq.s32.totalorder %s15, 1
    %p101 = por %p99, %p100
    %p102 = scmp.ne.s32.totalorder %s93, %s94
    %p103 = scmp.eq.s32.totalorder %s15, 0
    %p104 = por %p102, %p103
    %p105 = scmp.ne.s32.totalorder %s93, %s94
    %p106 = scmp.eq.s32.totalorder %s16, 1
    %p107 = por %p105, %p106
    %p109 = scmp.ne.s32.totalorder %s94, %s108
    %p110 = scmp.eq.s32.totalorder %s16, 0
    %p111 = por %p109, %p110
    %s112 = ssub.s32 %s10, %s17
    %p113 = scmp.eq.s32.totalorder %s112, 0
    %s115 = sadd.s32 %s114, 1
    %s116 = scalar_select %p113, %s114, %s115
    %p119 = pneg %p113
    %p120 = scmp.eq.s32.totalorder %s10, 1
    %p121 = por %p119, %p120
    %p122 = scmp.ne.s32.totalorder %s114, %s117
    %p123 = scmp.eq.s32.totalorder %s10, 0
    %p124 = por %p122, %p123
    %p125 = scmp.ne.s32.totalorder %s114, %s117
    %p126 = scmp.eq.s32.totalorder %s15, 1
    %p127 = por %p125, %p126
    %p128 = scmp.ne.s32.totalorder %s117, %s118
    %p129 = scmp.eq.s32.totalorder %s15, 0
    %p130 = por %p128, %p129
    %p131 = scmp.ne.s32.totalorder %s117, %s118
    %p132 = scmp.eq.s32.totalorder %s16, 1
    %p133 = por %p131, %p132
    %p135 = scmp.ne.s32.totalorder %s118, %s134
    %p136 = scmp.eq.s32.totalorder %s16, 0
    %p137 = por %p135, %p136
    %p138 = scmp.le.s32.totalorder 1, %s10
    %p139 = scmp.lt.s32.totalorder %s10, 3
    %p140 = pnand %p138, %p139
    %p141 = pneg %p140
    // Predicated region
    $region9: #{unet_upsample.1} parent=5 // pred_check
      _
    $region10: #{unet_upsample.1} parent=5 // pred_check_branch
      %143 = sbr.rel (%p140) target = $region12
    $region11: #{unet_upsample.1} parent=5 // pred_region
      %s144 = ssub.s32 %s10, 1
      // Predicated region
      $region13: #{unet_upsample.1} parent=11 // pred_check
        %p145 = pneg %p83
      $region14: #{unet_upsample.1} parent=11 // pred_check_branch
        %147 = sbr.rel (%p145) target = $region16
      $region15: #{unet_upsample.1} parent=11 // pred_region
        _
      $region16: #{unet_upsample.1} parent=11 // pred_fallthru
        _
      // Predicated region
      $region17: #{unet_upsample.1} parent=11 // pred_check
        %p148 = pneg %p104
      $region18: #{unet_upsample.1} parent=11 // pred_check_branch
        %150 = sbr.rel (%p148) target = $region20
      $region19: #{unet_upsample.1} parent=11 // pred_region
        _
      $region20: #{unet_upsample.1} parent=11 // pred_fallthru
        _
    $region12: #{unet_upsample.1} parent=5 // pred_fallthru
      _
    %p151 = scmp.lt.s32.totalorder %s10, 2
    // Predicated region
    $region21: #{unet_upsample.1} parent=5 // pred_check
      %p152 = pneg %p151
    $region22: #{unet_upsample.1} parent=5 // pred_check_branch
      %154 = sbr.rel (%p152) target = $region24
    $region23: #{unet_upsample.1} parent=5 // pred_region
      // Predicated region
      $region25: #{unet_upsample.1} parent=23 // pred_check
        %p155 = pneg %p30
      $region26: #{unet_upsample.1} parent=23 // pred_check_branch
        %157 = sbr.rel (%p155) target = $region28
      $region27: #{unet_upsample.1} parent=23 // pred_region
        %s158 = smul.u32 8, %s10
        %p159 = scmp.lt.s32.totalorder %s158, 15
        %s160 = scalar_select %p159, %s158, 15
        %s161 = smul.addr %s160, 4
        %s162 = scalar_lea.vmem %s0, %s161
        %s163 = smul.u32 8, %s10
      $region28: #{unet_upsample.1} parent=23 // pred_fallthru
        _
      // Predicated region
      $region29: #{unet_upsample.1} parent=23 // pred_check
        %p164 = pneg %p56
      $region30: #{unet_upsample.1} parent=23 // pred_check_branch
        %166 = sbr.rel (%p164) target = $region32
      $region31: #{unet_upsample.1} parent=23 // pred_region
        %s167 = smul.u32 8, %s10
        %p168 = scmp.lt.s32.totalorder %s167, 15
        %s169 = scalar_select %p168, %s167, 15
        %s170 = smul.addr %s169, 2
        %s171 = smul.addr %s170, 8
        %s172 = scalar_lea.vmem %s1, %s171
        %s173 = smul.u32 8, %s10
      $region32: #{unet_upsample.1} parent=23 // pred_fallthru
        _
    $region24: #{unet_upsample.1} parent=5 // pred_fallthru
      _
    %p174 = scmp.le.s32.totalorder 1, %s10
    %p175 = scmp.lt.s32.totalorder %s10, 3
    %p176 = pnand %p174, %p175
    %p177 = pneg %p176
    // Predicated region
    $region33: #{unet_upsample.1} parent=5 // pred_check
      _
    $region34: #{unet_upsample.1} parent=5 // pred_check_branch
      %179 = sbr.rel (%p176) target = $region36
    $region35: #{unet_upsample.1} parent=5 // pred_region
      %s180 = ssub.s32 %s10, 1
      %s181 = smul.u32 8, %s15
      %p182 = scmp.lt.s32.totalorder %s181, 15
      %s183 = scalar_select %p182, %s181, 15
      %s184 = smul.addr %s183, 4
      %s185 = scalar_lea.vmem %s0, %s184
      %p186 = pneg %p36
      %p187 = pneg %p33
      %s188 = smul.u32 8, %s15
      %p189 = scmp.lt.s32.totalorder %s188, 15
      %s190 = scalar_select %p189, %s188, 15
      %s191 = smul.addr %s190, 2
      %s192 = smul.addr %s191, 8
      %s193 = scalar_lea.vmem %s1, %s192
      %p194 = pneg %p62
      %p195 = pneg %p59
      %p196 = pneg %p83
      %p197 = pneg %p80
      %p198 = pneg %p104
      %p199 = pneg %p101
      %p200 = pneg %p130
      %p201 = pneg %p127
      %s202 = smul.u32 8, %s15
      %p203 = scmp.lt.s32.totalorder %s202, 15
      %s204 = scalar_select %p203, %s202, 15
      %s205 = smul.addr %s204, 2
      %s206 = smul.addr %s205, 8
      %s207 = scalar_lea.vmem %s4, %s206
      %s208 = smul.u32 8, %s15
      %p209 = scmp.lt.s32.totalorder %s208, 15
      %s210 = scalar_select %p209, %s208, 15
      %s211 = smul.addr %s210, 4
      %s212 = scalar_lea.vmem %s0, %s211
      %s213 = smul.u32 8, %s15
      %s214 = smul.u32 8, %s15
      %p215 = scmp.lt.s32.totalorder %s214, 15
      %s216 = scalar_select %p215, %s214, 15
      %s217 = smul.addr %s216, 2
      %s218 = smul.addr %s217, 8
      %s219 = scalar_lea.vmem %s1, %s218
      %s220 = smul.u32 8, %s15
      %s221 = smul.u32 8, %s15
      %p222 = scmp.lt.s32.totalorder %s221, 15
      %s223 = scalar_select %p222, %s221, 15
      %s224 = smul.addr %s223, 2
      %s225 = smul.addr %s224, 8
      %s226 = scalar_lea.vmem %s4, %s225
      %s227 = smul.u32 8, %s15
      %v229 = vld [vmem:[%s212] sm:$0xf]
      %v230 = vld [vmem:[%s212 + $0x4] sm:$0xf]
      %v231 = vld [vmem:[%s212 + $0x8] sm:$0xf]
      %v232 = vld [vmem:[%s212 + $0xc] sm:$0xf]
      %v233 = vld [vmem:[%s212 + $0x10] sm:$0xf]
      %v234 = vld [vmem:[%s212 + $0x14] sm:$0xf]
      %v235 = vld [vmem:[%s212 + $0x18] sm:$0xf]
      %v236 = vld [vmem:[%s212 + $0x1c] sm:$0xf]
      %v237 = vld [vmem:[%s2] sm:$0xf]
      %v238 = vld [vmem:[%s2 + $0x4] sm:$0xf]
      %v239 = vld [vmem:[%s2 + $0x8] sm:$0xf]
      %v240 = vld [vmem:[%s2 + $0xc] sm:$0xf]
      %v241 = vld [vmem:[%s2 + $0x10] sm:$0xf]
      %v242 = vld [vmem:[%s2 + $0x14] sm:$0xf]
      %v243 = vld [vmem:[%s2 + $0x18] sm:$0xf]
      %v244 = vld [vmem:[%s2 + $0x1c] sm:$0xf]
      %v245 = vld [vmem:[%s3] sm:$0x1]
      %v247 = vlaneseq
      %v248 = vshrl.u32 %v247, 7
      %v249 = vsub.s32 0, %v248
      %v250 = vrot.slane %v245, %v249
      %v260 = vunpack.c.l.b16 %v229
      %v261 = vunpack.c.l.b16 %v230
      %v262 = vunpack.c.l.b16 %v231
      %v263 = vunpack.c.l.b16 %v232
      %v264 = vunpack.c.l.b16 %v233
      %v265 = vunpack.c.l.b16 %v234
      %v266 = vunpack.c.l.b16 %v235
      %v267 = vunpack.c.l.b16 %v236
      %v268 = vpack.c.b16 %v261, %v260
      %v269 = vpack.c.b16 %v263, %v262
      %v270 = vpack.c.b16 %v265, %v264
      %v271 = vpack.c.b16 %v267, %v266
      %v280 = vunpack.c.l.b16 %v237
      %v281 = vunpack.c.l.b16 %v238
      %v282 = vunpack.c.l.b16 %v239
      %v283 = vunpack.c.l.b16 %v240
      %v284 = vunpack.c.l.b16 %v241
      %v285 = vunpack.c.l.b16 %v242
      %v286 = vunpack.c.l.b16 %v243
      %v287 = vunpack.c.l.b16 %v244
      %v288 = vpack.c.b16 %v281, %v280
      %v289 = vpack.c.b16 %v283, %v282
      %v290 = vpack.c.b16 %v285, %v284
      %v291 = vpack.c.b16 %v287, %v286
      %vm296 = vcmask 523264
      %v298 = vsel %vm296, %v268, 0
      %v301 = vsel %vm296, %v269, 0
      %v304 = vsel %vm296, %v270, 0
      %v307 = vsel %vm296, %v271, 0
      %309 = vmatprep.subr.bf16.mxu0 0
      %310 = vmatpush1.bf16.msra.mxu0 %v288
      %311 = vmatprep.subr.bf16.mxu0 0
      %312 = vmatpush1.bf16.msra.mxu0 %v289
      %313 = vmatprep.subr.bf16.mxu0 0
      %314 = vmatpush1.bf16.msra.mxu0 %v290
      %315 = vmatprep.subr.bf16.mxu0 0
      %316 = vmatpush1.bf16.msra.mxu0 %v291
      %317 = vmatprep.subr.bf16.mxu0 0
      %318 = vmatpush1.bf16.msra.mxu0 0
      %319 = vmatprep.subr.bf16.mxu0 0
      %320 = vmatpush1.bf16.msra.mxu0 0
      %321 = vmatprep.subr.bf16.mxu0 0
      %322 = vmatpush1.bf16.msra.mxu0 0
      %323 = vmatprep.subr.bf16.mxu0 0
      %324 = vmatpush1.bf16.msra.mxu0 0
      %325 = vmatprep.subr.bf16.mxu0 0
      %326 = vmatpush1.bf16.msra.mxu0 0
      %327 = vmatprep.subr.bf16.mxu0 0
      %328 = vmatpush1.bf16.msra.mxu0 0
      %329 = vmatprep.subr.bf16.mxu0 0
      %330 = vmatpush1.bf16.msra.mxu0 0
      %331 = vmatprep.subr.bf16.mxu0 0
      %332 = vmatpush1.bf16.msra.mxu0 0
      %333 = vmatprep.subr.bf16.mxu0 0
      %334 = vmatpush1.bf16.msra.mxu0 0
      %335 = vmatprep.subr.bf16.mxu0 0
      %336 = vmatpush1.bf16.msra.mxu0 0
      %337 = vmatprep.subr.bf16.mxu0 0
      %338 = vmatpush1.bf16.msra.mxu0 0
      %339 = vmatprep.subr.bf16.mxu0 0
      %340 = vmatpush1.bf16.msra.mxu0 0
      %341 = vmatprep.mubr.bf16.mxu0 0
      %342 = vmatmul.mubr.bf16.gmra.mrb[0].mxu0 %v298
      %v343 = vpop.f32.mrb[0].mxu0
      %v344 = vadd.f32 %v250, %v343
      %v345 = vpop.f32.mrb[0].mxu0
      %v346 = vpop.f32.mrb[0].mxu0
      %v347 = vadd.f32 %v250, %v346
      %v348 = vpop.f32.mrb[0].mxu0
      %349 = vmatprep.mubr.bf16.mxu0 0
      %350 = vmatmul.mubr.bf16.gmra.mrb[0].mxu0 %v301
      %v351 = vpop.f32.mrb[0].mxu0
      %v352 = vadd.f32 %v250, %v351
      %v353 = vpop.f32.mrb[0].mxu0
      %v354 = vpop.f32.mrb[0].mxu0
      %v355 = vadd.f32 %v250, %v354
      %v356 = vpop.f32.mrb[0].mxu0
      %357 = vmatprep.mubr.bf16.mxu0 0
      %358 = vmatmul.mubr.bf16.gmra.mrb[0].mxu0 %v304
      %v359 = vpop.f32.mrb[0].mxu0
      %v360 = vadd.f32 %v250, %v359
      %v361 = vpop.f32.mrb[0].mxu0
      %v362 = vpop.f32.mrb[0].mxu0
      %v363 = vadd.f32 %v250, %v362
      %v364 = vpop.f32.mrb[0].mxu0
      %365 = vmatprep.mubr.bf16.mxu0 0
      %366 = vmatmul.mubr.bf16.gmra.mrb[0].mxu0 %v307
      %v367 = vpop.f32.mrb[0].mxu0
      %v368 = vadd.f32 %v250, %v367
      %v369 = vpop.f32.mrb[0].mxu0
      %v370 = vpop.f32.mrb[0].mxu0
      %v371 = vadd.f32 %v250, %v370
      %v372 = vpop.f32.mrb[0].mxu0
      %373 = vdwg.mxu0
      %v374 = vld [vmem:[%s219] sm:$0xff]
      %v375 = vld [vmem:[%s219 + $0x8] sm:$0xff]
      %v376 = vld [vmem:[%s219 + $0x10] sm:$0xff]
      %v377 = vld [vmem:[%s219 + $0x18] sm:$0xff]
      %v378 = vld [vmem:[%s219 + $0x20] sm:$0xff]
      %v379 = vld [vmem:[%s219 + $0x28] sm:$0xff]
      %v380 = vld [vmem:[%s219 + $0x30] sm:$0xff]
      %v381 = vld [vmem:[%s219 + $0x38] sm:$0xff]
      %v382 = vld [vmem:[%s219 + $0x40] sm:$0xff]
      %v383 = vld [vmem:[%s219 + $0x48] sm:$0xff]
      %v384 = vld [vmem:[%s219 + $0x50] sm:$0xff]
      %v385 = vld [vmem:[%s219 + $0x58] sm:$0xff]
      %v386 = vld [vmem:[%s219 + $0x60] sm:$0xff]
      %v387 = vld [vmem:[%s219 + $0x68] sm:$0xff]
      %v388 = vld [vmem:[%s219 + $0x70] sm:$0xff]
      %v389 = vld [vmem:[%s219 + $0x78] sm:$0xff]
      %398 = vrot.lane.b32.xlu0 %v374, 32
      %v399 = vpop.permute.xlu0 %398
      %400 = vrot.lane.b32.xlu0 %v376, 32
      %v401 = vpop.permute.xlu0 %400
      %402 = vrot.lane.b32.xlu0 %v378, 32
      %v403 = vpop.permute.xlu0 %402
      %404 = vrot.lane.b32.xlu0 %v380, 32
      %v405 = vpop.permute.xlu0 %404
      %406 = vrot.lane.b32.xlu0 %v382, 32
      %v407 = vpop.permute.xlu0 %406
      %408 = vrot.lane.b32.xlu0 %v384, 32
      %v409 = vpop.permute.xlu0 %408
      %410 = vrot.lane.b32.xlu0 %v386, 32
      %v411 = vpop.permute.xlu0 %410
      %412 = vrot.lane.b32.xlu0 %v388, 32
      %v413 = vpop.permute.xlu0 %412
      %430 = vrot.lane.b32.xlu0 %v344, 32
      %v431 = vpop.permute.xlu0 %430
      %432 = vrot.lane.b32.xlu0 %v347, 32
      %v433 = vpop.permute.xlu0 %432
      %434 = vrot.lane.b32.xlu0 %v352, 32
      %v435 = vpop.permute.xlu0 %434
      %436 = vrot.lane.b32.xlu0 %v355, 32
      %v437 = vpop.permute.xlu0 %436
      %438 = vrot.lane.b32.xlu0 %v360, 32
      %v439 = vpop.permute.xlu0 %438
      %440 = vrot.lane.b32.xlu0 %v363, 32
      %v441 = vpop.permute.xlu0 %440
      %442 = vrot.lane.b32.xlu0 %v368, 32
      %v443 = vpop.permute.xlu0 %442
      %444 = vrot.lane.b32.xlu0 %v371, 32
      %v445 = vpop.permute.xlu0 %444
      %454 = vrot.lane.b32.xlu0 %v374, 64
      %v455 = vpop.permute.xlu0 %454
      %456 = vrot.lane.b32.xlu0 %v376, 64
      %v457 = vpop.permute.xlu0 %456
      %458 = vrot.lane.b32.xlu0 %v378, 64
      %v459 = vpop.permute.xlu0 %458
      %460 = vrot.lane.b32.xlu0 %v380, 64
      %v461 = vpop.permute.xlu0 %460
      %462 = vrot.lane.b32.xlu0 %v382, 64
      %v463 = vpop.permute.xlu0 %462
      %464 = vrot.lane.b32.xlu0 %v384, 64
      %v465 = vpop.permute.xlu0 %464
      %466 = vrot.lane.b32.xlu0 %v386, 64
      %v467 = vpop.permute.xlu0 %466
      %468 = vrot.lane.b32.xlu0 %v388, 64
      %v469 = vpop.permute.xlu0 %468
      %vm478 = vcmask 261120
      %v479 = vsel %vm478, %v344, %v399
      %v480 = vsel %vm478, %v347, %v401
      %v481 = vsel %vm478, %v352, %v403
      %v482 = vsel %vm478, %v355, %v405
      %v483 = vsel %vm478, %v360, %v407
      %v484 = vsel %vm478, %v363, %v409
      %v485 = vsel %vm478, %v368, %v411
      %v486 = vsel %vm478, %v371, %v413
      %v487 = vsel %vm296, %v479, %v431
      %v488 = vsel %vm296, %v480, %v433
      %v489 = vsel %vm296, %v481, %v435
      %v490 = vsel %vm296, %v482, %v437
      %v491 = vsel %vm296, %v483, %v439
      %v492 = vsel %vm296, %v484, %v441
      %v493 = vsel %vm296, %v485, %v443
      %v494 = vsel %vm296, %v486, %v445
      %vm495 = vcmask 785408
      %v496 = vsel %vm495, %v487, %v455
      %v497 = vsel %vm495, %v488, %v457
      %v498 = vsel %vm495, %v489, %v459
      %v499 = vsel %vm495, %v490, %v461
      %v500 = vsel %vm495, %v491, %v463
      %v501 = vsel %vm495, %v492, %v465
      %v502 = vsel %vm495, %v493, %v467
      %v503 = vsel %vm495, %v494, %v469
      %504 = vst [vmem:[%s226] sm:$0xff] %v496
      %505 = vst [vmem:[%s226 + $0x10] sm:$0xff] %v497
      %506 = vst [vmem:[%s226 + $0x20] sm:$0xff] %v498
      %507 = vst [vmem:[%s226 + $0x30] sm:$0xff] %v499
      %508 = vst [vmem:[%s226 + $0x40] sm:$0xff] %v500
      %509 = vst [vmem:[%s226 + $0x50] sm:$0xff] %v501
      %510 = vst [vmem:[%s226 + $0x60] sm:$0xff] %v502
      %511 = vst [vmem:[%s226 + $0x70] sm:$0xff] %v503
      %512 = vrot.lane.b32.xlu0 %v344, 64
      %v513 = vpop.permute.xlu0 %512
      %514 = vrot.lane.b32.xlu0 %v347, 64
      %v515 = vpop.permute.xlu0 %514
      %516 = vrot.lane.b32.xlu0 %v352, 64
      %v517 = vpop.permute.xlu0 %516
      %518 = vrot.lane.b32.xlu0 %v355, 64
      %v519 = vpop.permute.xlu0 %518
      %520 = vrot.lane.b32.xlu0 %v360, 64
      %v521 = vpop.permute.xlu0 %520
      %522 = vrot.lane.b32.xlu0 %v363, 64
      %v523 = vpop.permute.xlu0 %522
      %524 = vrot.lane.b32.xlu0 %v368, 64
      %v525 = vpop.permute.xlu0 %524
      %526 = vrot.lane.b32.xlu0 %v371, 64
      %v527 = vpop.permute.xlu0 %526
      %544 = vrot.lane.b32.xlu0 %v375, 32
      %v545 = vpop.permute.xlu0 %544
      %546 = vrot.lane.b32.xlu0 %v377, 32
      %v547 = vpop.permute.xlu0 %546
      %548 = vrot.lane.b32.xlu0 %v379, 32
      %v549 = vpop.permute.xlu0 %548
      %550 = vrot.lane.b32.xlu0 %v381, 32
      %v551 = vpop.permute.xlu0 %550
      %552 = vrot.lane.b32.xlu0 %v383, 32
      %v553 = vpop.permute.xlu0 %552
      %554 = vrot.lane.b32.xlu0 %v385, 32
      %v555 = vpop.permute.xlu0 %554
      %556 = vrot.lane.b32.xlu0 %v387, 32
      %v557 = vpop.permute.xlu0 %556
      %558 = vrot.lane.b32.xlu0 %v389, 32
      %v559 = vpop.permute.xlu0 %558
      %568 = vrot.lane.b32.xlu0 %v344, 96
      %v569 = vpop.permute.xlu0 %568
      %570 = vrot.lane.b32.xlu0 %v347, 96
      %v571 = vpop.permute.xlu0 %570
      %572 = vrot.lane.b32.xlu0 %v352, 96
      %v573 = vpop.permute.xlu0 %572
      %574 = vrot.lane.b32.xlu0 %v355, 96
      %v575 = vpop.permute.xlu0 %574
      %576 = vrot.lane.b32.xlu0 %v360, 96
      %v577 = vpop.permute.xlu0 %576
      %578 = vrot.lane.b32.xlu0 %v363, 96
      %v579 = vpop.permute.xlu0 %578
      %580 = vrot.lane.b32.xlu0 %v368, 96
      %v581 = vpop.permute.xlu0 %580
      %582 = vrot.lane.b32.xlu0 %v371, 96
      %v583 = vpop.permute.xlu0 %582
      %592 = vrot.lane.b32.xlu0 %v375, 64
      %v593 = vpop.permute.xlu0 %592
      %594 = vrot.lane.b32.xlu0 %v377, 64
      %v595 = vpop.permute.xlu0 %594
      %596 = vrot.lane.b32.xlu0 %v379, 64
      %v597 = vpop.permute.xlu0 %596
      %598 = vrot.lane.b32.xlu0 %v381, 64
      %v599 = vpop.permute.xlu0 %598
      %600 = vrot.lane.b32.xlu0 %v383, 64
      %v601 = vpop.permute.xlu0 %600
      %602 = vrot.lane.b32.xlu0 %v385, 64
      %v603 = vpop.permute.xlu0 %602
      %604 = vrot.lane.b32.xlu0 %v387, 64
      %v605 = vpop.permute.xlu0 %604
      %606 = vrot.lane.b32.xlu0 %v389, 64
      %v607 = vpop.permute.xlu0 %606
      %v616 = vsel %vm478, %v513, %v545
      %v617 = vsel %vm478, %v515, %v547
      %v618 = vsel %vm478, %v517, %v549
      %v619 = vsel %vm478, %v519, %v551
      %v620 = vsel %vm478, %v521, %v553
      %v621 = vsel %vm478, %v523, %v555
      %v622 = vsel %vm478, %v525, %v557
      %v623 = vsel %vm478, %v527, %v559
      %v624 = vsel %vm296, %v616, %v569
      %v625 = vsel %vm296, %v617, %v571
      %v626 = vsel %vm296, %v618, %v573
      %v627 = vsel %vm296, %v619, %v575
      %v628 = vsel %vm296, %v620, %v577
      %v629 = vsel %vm296, %v621, %v579
      %v630 = vsel %vm296, %v622, %v581
      %v631 = vsel %vm296, %v623, %v583
      %v632 = vsel %vm495, %v624, %v593
      %v633 = vsel %vm495, %v625, %v595
      %v634 = vsel %vm495, %v626, %v597
      %v635 = vsel %vm495, %v627, %v599
      %v636 = vsel %vm495, %v628, %v601
      %v637 = vsel %vm495, %v629, %v603
      %v638 = vsel %vm495, %v630, %v605
      %v639 = vsel %vm495, %v631, %v607
      %s640 = scalar_lea.vmem %s226, 8
      %641 = vst [vmem:[%s640] sm:$0xff] %v632
      %642 = vst [vmem:[%s640 + $0x10] sm:$0xff] %v633
      %643 = vst [vmem:[%s640 + $0x20] sm:$0xff] %v634
      %644 = vst [vmem:[%s640 + $0x30] sm:$0xff] %v635
      %645 = vst [vmem:[%s640 + $0x40] sm:$0xff] %v636
      %646 = vst [vmem:[%s640 + $0x50] sm:$0xff] %v637
      %647 = vst [vmem:[%s640 + $0x60] sm:$0xff] %v638
      %648 = vst [vmem:[%s640 + $0x70] sm:$0xff] %v639
      %s649 = smul.u32 8, %s15
      %p650 = scmp.lt.s32.totalorder %s649, 15
      %s651 = scalar_select %p650, %s649, 15
      %s652 = smul.addr %s651, 2
      %s653 = smul.addr %s652, 8
      %s654 = scalar_lea.vmem %s4, %s653
      // Predicated region
      $region37: #{unet_upsample.1} parent=35 // pred_check
        %p655 = pneg %p127
      $region38: #{unet_upsample.1} parent=35 // pred_check_branch
        %657 = sbr.rel (%p655) target = $region40
      $region39: #{unet_upsample.1} parent=35 // pred_region
        %s658 = smul.u32 8, %s15
      $region40: #{unet_upsample.1} parent=35 // pred_fallthru
        _
    $region36: #{unet_upsample.1} parent=5 // pred_fallthru
      _
    %p659 = scmp.le.s32.totalorder 2, %s10
    // Predicated region
    $region41: #{unet_upsample.1} parent=5 // pred_check
      %p660 = pneg %p659
    $region42: #{unet_upsample.1} parent=5 // pred_check_branch
      %662 = sbr.rel (%p660) target = $region44
    $region43: #{unet_upsample.1} parent=5 // pred_region
      %s663 = ssub.s32 %s10, 2
      // Predicated region
      $region45: #{unet_upsample.1} parent=43 // pred_check
        %p664 = pneg %p133
      $region46: #{unet_upsample.1} parent=43 // pred_check_branch
        %666 = sbr.rel (%p664) target = $region48
      $region47: #{unet_upsample.1} parent=43 // pred_region
        %s667 = smul.u32 8, %s16
        %p668 = scmp.lt.s32.totalorder %s667, 15
        %s669 = scalar_select %p668, %s667, 15
        %s670 = smul.addr %s669, 2
        %s671 = smul.addr %s670, 8
        %s672 = scalar_lea.vmem %s4, %s671
      $region48: #{unet_upsample.1} parent=43 // pred_fallthru
        _
    $region44: #{unet_upsample.1} parent=5 // pred_fallthru
      _
  $region6: #{unet_upsample.1} parent=0 // loop_footer
    %s14 = sadd.s32 1, %s10
  $region7: #{unet_upsample.1} parent=0 // loop_footer_branch
    %9 = sbr.rel target = $region3
  $region8: #{unet_upsample.1} parent=0 // loop_exit
    _

</llo_original>
